<compile_context>
chip_gen: v7x
topology: tpu7x:2x2x1
jax: 0.10.0
libtpu: 0.0.40
codegen_flags: <defaults>
</compile_context>

<pallas_src>
import jax
import jax.numpy as jnp
from jax import lax
from jax.experimental import pallas as pl
from jax.experimental.pallas import tpu as pltpu

F32 = jnp.float32
BF16 = jnp.bfloat16
HIGH = lax.Precision.HIGHEST      # reference only
DP = 128                          # lane-dense padded feature width
LEAKY = 0.2


def _round_up(x, m):
    return ((x + m - 1) // m) * m


def _pad2(a, rows, cols, dtype):
    out = jnp.zeros((rows, cols), dtype)
    return out.at[:a.shape[0], :a.shape[1]].set(a.astype(dtype))


def _cparams(dims):
    return pltpu.CompilerParams(dimension_semantics=dims,
                                vmem_limit_bytes=32 * 1024 * 1024)


# ----------------------------- Pallas kernels -------------------------------

def _ft_kernel(x_ref, w_ref, b_ref, o_ref, acc_ref):
    """Tiled Linear(in_dim -> h_dim): grid = (row tiles, K tiles)."""
    @pl.when(pl.program_id(1) == 0)
    def _():
        acc_ref[...] = jnp.zeros_like(acc_ref)

    acc_ref[...] += jnp.dot(x_ref[...], w_ref[...],
                            preferred_element_type=jnp.float32)

    @pl.when(pl.program_id(1) == pl.num_programs(1) - 1)
    def _():
        o_ref[...] = acc_ref[...] + b_ref[...]


def feature_transform(x_pad, w_pad, b_pad):
    n, k = x_pad.shape
    tm = next((t for t in (512, 256, 128) if n % t == 0), n)
    tk = 512
    assert k % tk == 0
    return pl.pallas_call(
        _ft_kernel,
        out_shape=jax.ShapeDtypeStruct((n, DP), F32),
        grid_spec=pltpu.PrefetchScalarGridSpec(
            num_scalar_prefetch=0,
            grid=(n // tm, k // tk),
            in_specs=[pl.BlockSpec((tm, tk), lambda i, kk: (i, kk)),
                      pl.BlockSpec((tk, DP), lambda i, kk: (kk, 0)),
                      pl.BlockSpec((1, DP), lambda i, kk: (0, 0))],
            out_specs=pl.BlockSpec((tm, DP), lambda i, kk: (i, 0)),
            scratch_shapes=[pltpu.VMEM((tm, DP), F32)]),
        compiler_params=_cparams(("parallel", "arbitrary")),
    )(x_pad, w_pad, b_pad)


def _attn_layer_kernel(src_ref, dst_ref, adj_ref, wt_ref, bt_ref,
                       was_ref, wad_ref, ba_ref, hbias_ref, o_ref, acc_ref):
    """One attention RelGraphConv layer for one dst node type.

    Grid axis = relations ("arbitrary"): accumulate messages of every relation
    into a VMEM f32 scratch, finalize with h_bias + ReLU on the last relation.
    """
    r = pl.program_id(0)

    @pl.when(r == 0)
    def _():
        acc_ref[...] = jnp.zeros_like(acc_ref)

    src = src_ref[0]                          # (Np, DP) f32
    src_b = src.astype(BF16)                  # MXU operand
    dst = dst_ref[...]                        # (Np, DP) f32
    adj = adj_ref[0]                          # (Np, Np) bf16 (0/1)

    # transform[rel](h_src) — bf16 MXU, f32 accumulate
    transformed = (jnp.dot(src_b, wt_ref[0], preferred_element_type=jnp.float32)
                   + bt_ref[0])                                     # (Np, DP)

    # attention logits: LeakyReLU(w_src.h[u] + w_dst.h[v] + b)
    s_src = lax.dot_general(was_ref[0], src_b,                       # (1, Np)
                            dimension_numbers=(((1,), (1,)), ((), ())),
                            preferred_element_type=jnp.float32)
    s_dst = jnp.sum(dst * wad_ref[0], axis=-1, keepdims=True)        # (Np, 1) VPU
    logits = s_dst + s_src + ba_ref[0]                               # (Np, Np)
    logits = jnp.where(logits >= 0.0, logits, LEAKY * logits)

    # global edge softmax over the relation (padded entries are non-edges)
    edge = adj.astype(F32) > 0.0
    masked = jnp.where(edge, logits, jnp.float32(-1e30))
    m = jnp.max(jnp.max(masked, axis=1, keepdims=True), axis=0, keepdims=True)
    e = jnp.where(edge, jnp.exp(masked - m), 0.0)
    denom = jnp.sum(jnp.sum(e, axis=1, keepdims=True), axis=0, keepdims=True)

    # msg[v] = sum_u a(u,v) * transformed[u]; scale the small (Np, DP) result
    # by 1/denom (EUP approx reciprocal) instead of the (Np, Np) matrix.
    msg = jnp.dot(e.astype(BF16), transformed.astype(BF16),
                  preferred_element_type=jnp.float32)
    acc_ref[...] += msg * pl.reciprocal(denom, approx=True)

    @pl.when(r == pl.num_programs(0) - 1)
    def _():
        o_ref[...] = jnp.maximum(acc_ref[...] + hbias_ref[...], 0.0)


def attn_layer_dst(src_stack, dst_feat, adj_stack, wt, bt, was, wad, ba, h_bias):
    # TODO(synk): for graphs whose (Np, Np) dense-adjacency tile exceeds VMEM,
    # tile the source axis with an online (flash-style) edge softmax in scratch.
    nrel, npad, _ = adj_stack.shape
    return pl.pallas_call(
        _attn_layer_kernel,
        out_shape=jax.ShapeDtypeStruct((npad, DP), F32),
        grid_spec=pltpu.PrefetchScalarGridSpec(
            num_scalar_prefetch=0,
            grid=(nrel,),
            in_specs=[pl.BlockSpec((1, npad, DP), lambda r: (r, 0, 0)),    # src
                      pl.BlockSpec((npad, DP), lambda r: (0, 0)),          # dst
                      pl.BlockSpec((1, npad, npad), lambda r: (r, 0, 0)),  # adj
                      pl.BlockSpec((1, DP, DP), lambda r: (r, 0, 0)),      # w_t
                      pl.BlockSpec((1, 1, DP), lambda r: (r, 0, 0)),       # b_t
                      pl.BlockSpec((1, 1, DP), lambda r: (r, 0, 0)),       # w_a_src
                      pl.BlockSpec((1, 1, DP), lambda r: (r, 0, 0)),       # w_a_dst
                      pl.BlockSpec((1, 1, 1), lambda r: (r, 0, 0)),        # b_a
                      pl.BlockSpec((1, DP), lambda r: (0, 0))],            # h_bias
            out_specs=pl.BlockSpec((npad, DP), lambda r: (0, 0)),
            scratch_shapes=[pltpu.VMEM((npad, DP), F32)]),
        compiler_params=_cparams(("arbitrary",)),
    )(src_stack, dst_feat, adj_stack, wt, bt, was, wad, ba, h_bias)


def _out_layer_kernel(src_ref, adj_ref, invdeg_ref, w_ref, bias_ref, o_ref,
                      acc_ref):
    """Output RelGraphConv (no attention) for one dst type; grid = relations."""
    r = pl.program_id(0)

    @pl.when(r == 0)
    def _():
        acc_ref[...] = jnp.zeros_like(acc_ref)

    agg = jnp.dot(adj_ref[0], src_ref[0].astype(BF16),
                  preferred_element_type=jnp.float32) * invdeg_ref[0]
    acc_ref[...] += jnp.dot(agg.astype(BF16), w_ref[0],
                            preferred_element_type=jnp.float32)

    @pl.when(r == pl.num_programs(0) - 1)
    def _():
        o_ref[...] = acc_ref[...] + bias_ref[...]


def out_layer_dst(src_stack, adj_stack, invdeg_stack, w_stack, out_bias):
    nrel, npad, _ = adj_stack.shape
    return pl.pallas_call(
        _out_layer_kernel,
        out_shape=jax.ShapeDtypeStruct((npad, DP), F32),
        grid_spec=pltpu.PrefetchScalarGridSpec(
            num_scalar_prefetch=0,
            grid=(nrel,),
            in_specs=[pl.BlockSpec((1, npad, DP), lambda r: (r, 0, 0)),
                      pl.BlockSpec((1, npad, npad), lambda r: (r, 0, 0)),
                      pl.BlockSpec((1, npad, 1), lambda r: (r, 0, 0)),
                      pl.BlockSpec((1, DP, DP), lambda r: (r, 0, 0)),
                      pl.BlockSpec((1, DP), lambda r: (0, 0))],
            out_specs=pl.BlockSpec((npad, DP), lambda r: (0, 0)),
            scratch_shapes=[pltpu.VMEM((npad, DP), F32)]),
        compiler_params=_cparams(("arbitrary",)),
    )(src_stack, adj_stack, invdeg_stack, w_stack, out_bias)


# ------------------------------ parameters ----------------------------------

def init_params(key, rel_names, in_dim, h_dim, out_dim, num_attn_layers):
    def glorot(k, shape):
        fan_in, fan_out = shape[-2], shape[-1]
        lim = (6.0 / (fan_in + fan_out)) ** 0.5
        return jax.random.uniform(k, shape, F32, -lim, lim)

    keys = iter(jax.random.split(key, 256))
    params = {
        "ft_w": glorot(next(keys), (in_dim, h_dim)),
        "ft_b": 0.01 * jax.random.normal(next(keys), (1, h_dim), F32),
        "layers": [],
        "out_w": {},
        "out_bias": jnp.zeros((1, out_dim), F32),       # nn.init.zeros_
    }
    for _ in range(num_attn_layers):
        rels = {}
        for rel in rel_names:
            rels[rel] = dict(
                w_t=glorot(next(keys), (h_dim, h_dim)),
                b_t=0.01 * jax.random.normal(next(keys), (1, h_dim), F32),
                w_a_src=glorot(next(keys), (1, h_dim)),
                w_a_dst=glorot(next(keys), (h_dim, 1)),
                b_a=0.01 * jax.random.normal(next(keys), (1, 1), F32),
            )
        params["layers"].append(dict(rels=rels,
                                     h_bias=jnp.zeros((1, h_dim), F32)))
    for rel in rel_names:
        params["out_w"][rel] = glorot(next(keys), (h_dim, out_dim))
    return params


def prepare_model(params, adjs, canonical_etypes, npad, kp):
    """One-time padding / bf16 casting / per-dst-type stacking."""
    groups = {}
    for (src_t, rel, dst_t) in canonical_etypes:
        groups.setdefault(dst_t, []).append((src_t, rel))

    prep = {"npad": npad, "groups": groups}
    prep["ft_w"] = _pad2(params["ft_w"], kp, DP, BF16)
    prep["ft_b"] = _pad2(params["ft_b"], 1, DP, F32)

    adj_p, invdeg = {}, {}
    for (_, rel, _) in canonical_etypes:
        a = adjs[rel]
        adj_p[rel] = _pad2(a, npad, npad, BF16)
        deg = jnp.maximum(jnp.sum(a, axis=1), 1.0)               # norm='right'
        invdeg[rel] = jnp.zeros((npad, 1), F32).at[:a.shape[0], 0].set(1.0 / deg)
    prep["adj_stack"] = {d: jnp.stack([adj_p[r] for _, r in lst])
                         for d, lst in groups.items()}
    prep["invdeg_stack"] = {d: jnp.stack([invdeg[r] for _, r in lst])
                            for d, lst in groups.items()}

    prep["layers"] = []
    for lp in params["layers"]:
        layer = {"h_bias": _pad2(lp["h_bias"], 1, DP, F32), "per_dst": {}}
        for d, lst in groups.items():
            rels = [lp["rels"][r] for _, r in lst]
            layer["per_dst"][d] = dict(
                wt=jnp.stack([_pad2(p["w_t"], DP, DP, BF16) for p in rels]),
                bt=jnp.stack([_pad2(p["b_t"], 1, DP, F32) for p in rels]),
                was=jnp.stack([_pad2(p["w_a_src"], 1, DP, BF16) for p in rels]),
                wad=jnp.stack([_pad2(p["w_a_dst"].T, 1, DP, F32) for p in rels]),
                ba=jnp.stack([p["b_a"].astype(F32) for p in rels]),
            )
        prep["layers"].append(layer)

    prep["out_w_stack"] = {d: jnp.stack([_pad2(params["out_w"][r], DP, DP, BF16)
                                         for _, r in lst])
                           for d, lst in groups.items()}
    prep["out_bias"] = _pad2(params["out_bias"], 1, DP, F32)
    return prep


# ------------------------------ SHADE forward --------------------------------

def shade_forward(prep, feats_padded, ntypes, n_nodes, h_dim, out_dim):
    groups = prep["groups"]

    # 1. feature_transform (tiled rows x 512-wide K grid, f32 accumulator)
    h = {nt: feature_transform(feats_padded[nt], prep["ft_w"], prep["ft_b"])
         for nt in ntypes}

    # 2. attention RelGraphConvLayers — one fused, gridded call per dst type
    for layer in prep["layers"]:
        new_h = {}
        for nt in ntypes:
            if nt in groups:
                lst = groups[nt]
                src_stack = jnp.stack([h[s] for s, _ in lst])
                pd = layer["per_dst"][nt]
                new_h[nt] = attn_layer_dst(src_stack, h[nt],
                                           prep["adj_stack"][nt],
                                           pd["wt"], pd["bt"], pd["was"],
                                           pd["wad"], pd["ba"],
                                           layer["h_bias"])
            else:
                # ntype with no incoming relation: passthrough + bias + relu
                new_h[nt] = jnp.maximum(h[nt] + layer["h_bias"], 0.0)
        h = new_h

    latent = {nt: h[nt][:n_nodes[nt], :h_dim] for nt in ntypes}

    # 3. output_transform — fused per-relation GraphConv(right) + sum + bias
    out = {}
    for nt in ntypes:
        if nt in groups:
            lst = groups[nt]
            src_stack = jnp.stack([h[s] for s, _ in lst])
            o = out_layer_dst(src_stack, prep["adj_stack"][nt],
                              prep["invdeg_stack"][nt],
                              prep["out_w_stack"][nt], prep["out_bias"])
            out[nt] = o[:n_nodes[nt], :out_dim]
    return out, latent


# --------------------------- pure-JAX reference ------------------------------

def shade_reference(params, feats, adjs, canonical_etypes, ntypes):
    def lin(x, w, b):
        return jnp.dot(x, w, precision=HIGH) + b

    h = {nt: lin(feats[nt], params["ft_w"], params["ft_b"]) for nt in ntypes}
    for lp in params["layers"]:
        msgs = {nt: [] for nt in ntypes}
        for (src_t, rel, dst_t) in canonical_etypes:
            rp = lp["rels"][rel]
            src, dst, adj = h[src_t], h[dst_t], adjs[rel]
            transformed = lin(src, rp["w_t"], rp["b_t"])
            s_src = jnp.dot(src, rp["w_a_src"].T, precision=HIGH)
            s_dst = jnp.dot(dst, rp["w_a_dst"], precision=HIGH)
            logits = s_dst + s_src.T + rp["b_a"][0, 0]
            logits = jnp.where(logits >= 0.0, logits, LEAKY * logits)
            edge = adj > 0.0
            masked = jnp.where(edge, logits, -jnp.inf)
            e = jnp.where(edge, jnp.exp(masked - jnp.max(masked)), 0.0)
            a = e / jnp.sum(e)
            msgs[dst_t].append(jnp.dot(a, transformed, precision=HIGH))
        new_h = {}
        for nt in ntypes:
            acc = sum(msgs[nt]) if msgs[nt] else h[nt]
            new_h[nt] = jnp.maximum(acc + lp["h_bias"], 0.0)
        h = new_h
    latent = dict(h)
    msgs = {nt: [] for nt in ntypes}
    for (src_t, rel, dst_t) in canonical_etypes:
        adj = adjs[rel]
        deg = jnp.maximum(adj.sum(axis=1, keepdims=True), 1.0)
        agg = jnp.dot(adj, h[src_t], precision=HIGH) / deg
        msgs[dst_t].append(jnp.dot(agg, params["out_w"][rel], precision=HIGH))
    out = {nt: sum(msgs[nt]) + params["out_bias"] for nt in ntypes if msgs[nt]}
    return out, latent


# ---------------------------------- main -------------------------------------

if __name__ == "__main__":
    in_dim, h_dim, out_dim = 2307, 32, 8        # in_dim fixed by SHADE.__init__
    num_hidden_layers = 1                        # -> 2 attention layers total

    # Synthetic heterograph (replaces the DGL graph object):
    ntypes = ["author", "paper"]
    canonical_etypes = [("author", "writes", "paper"),
                        ("paper", "cites", "author")]
    rel_names = sorted({r for _, r, _ in canonical_etypes})
    n_nodes = {"author": 12, "paper": 10}

    key = jax.random.PRNGKey(0)
    k_feat, k_adj, k_param = jax.random.split(key, 3)

    feats = {}
    for i, nt in enumerate(ntypes):
        feats[nt] = jax.random.normal(jax.random.fold_in(k_feat, i),
                                      (n_nodes[nt], in_dim), F32)

    adjs = {}
    for i, (src_t, rel, dst_t) in enumerate(canonical_etypes):
        probs = jax.random.uniform(jax.random.fold_in(k_adj, i),
                                   (n_nodes[dst_t], n_nodes[src_t]))
        a = (probs < 0.35).astype(F32)
        adjs[rel] = a.at[0, 0].set(1.0)          # guarantee >=1 edge per relation

    params = init_params(k_param, rel_names, in_dim, h_dim, out_dim,
                         num_attn_layers=1 + num_hidden_layers)

    kp = _round_up(in_dim, 512)                  # 2560 = 5 * 512 (K tiles)
    npad = _round_up(max(n_nodes.values()), 8)   # global padded node count
    prep = prepare_model(params, adjs, canonical_etypes, npad, kp)
    feats_p = {nt: _pad2(feats[nt], npad, kp, BF16) for nt in ntypes}

    out, latent = shade_forward(prep, feats_p, ntypes, n_nodes, h_dim, out_dim)
    jax.block_until_ready(out)
    jax.block_until_ready(latent)

    ref_out, ref_latent = shade_reference(params, feats, adjs,
                                          canonical_etypes, ntypes)
    for nt in out:
        d = float(jnp.max(jnp.abs(out[nt] - ref_out[nt])))
        tol = float(5e-2 + 3e-2 * jnp.max(jnp.abs(ref_out[nt])))
        assert d < tol, f"output mismatch for {nt}: {d} (tol {tol})"
    for nt in latent:
        d = float(jnp.max(jnp.abs(latent[nt] - ref_latent[nt])))
        tol = float(5e-2 + 3e-2 * jnp.max(jnp.abs(ref_latent[nt])))
        assert d < tol, f"latent mismatch for {nt}: {d} (tol {tol})"

    print("KERNEL_OK")
</pallas_src>

<mosaic_0001>
module attributes {stable_mosaic.version = 11 : i64} {
  func.func @_ft_kernel(%arg0: i32, %arg1: i32, %arg2: memref<16x512xbf16, #tpu.memory_space<vmem>>, %arg3: memref<512x128xbf16, #tpu.memory_space<vmem>>, %arg4: memref<1x128xf32, #tpu.memory_space<vmem>>, %arg5: memref<16x128xf32, #tpu.memory_space<vmem>>, %arg6: memref<16x128xf32, #tpu.memory_space<vmem>>) attributes {dimension_semantics = [#tpu.dimension_semantics<parallel>, #tpu.dimension_semantics<arbitrary>], iteration_bounds = array<i64: 1, 5>, scalar_prefetch = 0 : i64, scratch_operands = 1 : i64, tpu.core_type = #tpu.core_type<tc>, window_params = [{transform_indices = @transform_0, window_bounds = array<i64: 16, 512>}, {transform_indices = @transform_1, window_bounds = array<i64: 512, 128>}, {pipeline_mode = #tpu.pipeline_mode<synchronous>, transform_indices = @transform_2, window_bounds = array<i64: 1, 128>}, {transform_indices = @transform_3, window_bounds = array<i64: 16, 128>}]} {
    %c0_i32 = arith.constant 0 : i32
    %0 = arith.cmpi eq, %arg1, %c0_i32 : i32
    %1 = arith.extui %0 : i1 to i32
    %c0_i32_0 = arith.constant 0 : i32
    %2 = arith.cmpi ne, %1, %c0_i32_0 : i32
    scf.if %2 {
      %cst_9 = arith.constant 0.000000e+00 : f32
      %12 = vector.broadcast %cst_9 : f32 to vector<16x128xf32>
      %c0_10 = arith.constant 0 : index
      %c0_11 = arith.constant 0 : index
      %13 = vector.load %arg6[%c0_10, %c0_11] : memref<16x128xf32, #tpu.memory_space<vmem>>, vector<16x128xf32>
      tpu.vector_store %arg6[%c0_10, %c0_11], %12 {strides = array<i32>} : memref<16x128xf32, #tpu.memory_space<vmem>>, vector<16x128xf32>,
    } else {
    }
    %c0 = arith.constant 0 : index
    %c0_1 = arith.constant 0 : index
    %3 = vector.load %arg6[%c0, %c0_1] : memref<16x128xf32, #tpu.memory_space<vmem>>, vector<16x128xf32>
    %c0_2 = arith.constant 0 : index
    %c0_3 = arith.constant 0 : index
    %4 = vector.load %arg2[%c0_2, %c0_3] : memref<16x512xbf16, #tpu.memory_space<vmem>>, vector<16x512xbf16>
    %c0_4 = arith.constant 0 : index
    %c0_5 = arith.constant 0 : index
    %5 = vector.load %arg3[%c0_4, %c0_5] : memref<512x128xbf16, #tpu.memory_space<vmem>>, vector<512x128xbf16>
    %cst = arith.constant dense<0.000000e+00> : vector<16x128xf32>
    %6 = tpu.matmul %4, %5, %cst {dimension_numbers = #tpu.dot_dimension_numbers<[1], [0], [0], [1], [0, 0, 1, 1], [], []>} : vector<16x512xbf16>, vector<512x128xbf16>, vector<16x128xf32> -> vector<16x128xf32>
    %7 = arith.addf %3, %6 : vector<16x128xf32>
    %c0_6 = arith.constant 0 : index
    %c0_7 = arith.constant 0 : index
    %8 = vector.load %arg6[%c0_6, %c0_7] : memref<16x128xf32, #tpu.memory_space<vmem>>, vector<16x128xf32>
    tpu.vector_store %arg6[%c0_6, %c0_7], %7 {strides = array<i32>} : memref<16x128xf32, #tpu.memory_space<vmem>>, vector<16x128xf32>,
    %c4_i32 = arith.constant 4 : i32
    %9 = arith.cmpi eq, %arg1, %c4_i32 : i32
    %10 = arith.extui %9 : i1 to i32
    %c0_i32_8 = arith.constant 0 : i32
    %11 = arith.cmpi ne, %10, %c0_i32_8 : i32
    scf.if %11 {
      %c0_9 = arith.constant 0 : index
      %c0_10 = arith.constant 0 : index
      %12 = vector.load %arg6[%c0_9, %c0_10] : memref<16x128xf32, #tpu.memory_space<vmem>>, vector<16x128xf32>
      %c0_11 = arith.constant 0 : index
      %c0_12 = arith.constant 0 : index
      %13 = vector.load %arg4[%c0_11, %c0_12] : memref<1x128xf32, #tpu.memory_space<vmem>>, vector<1x128xf32>
      %14 = vector.broadcast %13 : vector<1x128xf32> to vector<16x128xf32>
      %15 = arith.addf %12, %14 : vector<16x128xf32>
      %c0_13 = arith.constant 0 : index
      %c0_14 = arith.constant 0 : index
      %16 = vector.load %arg5[%c0_13, %c0_14] : memref<16x128xf32, #tpu.memory_space<vmem>>, vector<16x128xf32>
      tpu.vector_store %arg5[%c0_13, %c0_14], %15 {strides = array<i32>} : memref<16x128xf32, #tpu.memory_space<vmem>>, vector<16x128xf32>,
    } else {
    }
    return
  }
  func.func @transform_0(%arg0: i32, %arg1: i32) -> (i32, i32) {
    %c0_i32 = arith.constant 0 : i32
    return %arg0, %arg1 : i32, i32
  }
  func.func @transform_1(%arg0: i32, %arg1: i32) -> (i32, i32) {
    %c0_i32 = arith.constant 0 : i32
    %c0_i32_0 = arith.constant 0 : i32
    return %arg1, %c0_i32 : i32, i32
  }
  func.func @transform_2(%arg0: i32, %arg1: i32) -> (i32, i32) {
    %c0_i32 = arith.constant 0 : i32
    %c0_i32_0 = arith.constant 0 : i32
    %c0_i32_1 = arith.constant 0 : i32
    return %c0_i32, %c0_i32_0 : i32, i32
  }
  func.func @transform_3(%arg0: i32, %arg1: i32) -> (i32, i32) {
    %c0_i32 = arith.constant 0 : i32
    %c0_i32_0 = arith.constant 0 : i32
    return %arg0, %c0_i32 : i32, i32
  }
}

</mosaic_0001>

<llo_original>
// kernel: tpu_custom_call.1
$region0: #{tpu_custom_call.1}
  #allocation0 [shape = 'u32[]', space=smem, size = 0x4, offset = 0x4, fixed_abs, tag = 'smem constant byte address 0x4 - core index']
  #allocation1 [shape = 'u32[144,128]{1,0:T(1,128)}', space=vmem, size = 0x12000, scoped, tag = 'internal scratch']
  #allocation2 [shape = 'f32[16,128]{1,0:T(8,128)}', space=vmem, size = 0x2000, scoped, tag = 'scratch operand']
  %s0 = inlined_call_operand.hbm [shape: bf16[16,2560], index: 0, kind: input, shape index: {}]
  %s1 = inlined_call_operand.hbm [shape: bf16[2560,128], index: 1, kind: input, shape index: {}]
  %s2 = inlined_call_operand.vmem [shape: f32[1,128], index: 2, kind: input, shape index: {}]
  %s3 = inlined_call_operand.hbm [shape: f32[16,128], index: 3, kind: output, shape index: {}]
  %s4 = sld [smem:[#allocation0]]
  $region61: #{tpu_custom_call.1} parent=0
    _
  %s6 = ssub.s32 1, %s4
  %s7 = scalar_select 0, %s6, %s4
  $region1: #{tpu_custom_call.1} parent=0
    #allocation3 [shape = 'u8[32768]{0}', space=vmem, size = 0x8000, scoped, tag = 'input window, operand 0']
    #allocation4 [shape = 's32[2]{0}', space=sflag, size = 0x8, scoped, tag = 'scoped memory for tpu_custom_call.1']
    #allocation5 [shape = 's32[2]{0}', space=sflag, size = 0x8, scoped, tag = 'scoped memory for tpu_custom_call.1']
    #allocation6 [shape = 'u8[262144]{0}', space=vmem, size = 0x40000, scoped, tag = 'input window, operand 1']
    #allocation7 [shape = 's32[2]{0}', space=sflag, size = 0x8, scoped, tag = 'scoped memory for tpu_custom_call.1']
    #allocation8 [shape = 'u8[8192]{0}', space=vmem, size = 0x2000, scoped, tag = 'output window, operand 0, single buffered']
    %8 = vsyncpa [#allocation4], 0
    %s9 = scalar_lea.sflag [#allocation4], 1
    %10 = vsyncpa %s9, 0
    %11 = vsyncpa [#allocation7], 0
    %s12 = scalar_lea.sflag [#allocation7], 1
    %13 = vsyncpa %s12, 0
    %14 = vsyncpa [#allocation5], 0
    loop: start=0, step=1, limit=7
    $region2: #{tpu_custom_call.1} parent=1 // loop_pre_header
      _
    $region3: #{tpu_custom_call.1} parent=1 // loop_header
      %s16 = sphi 0, %s20
      %p17 = scmp.ge.s32.totalorder %s16, 7
      %s23 = sphi 0, %s35
      %s24 = sphi 0, %s31
      %s25 = sphi 0, %s23
      %s26 = sphi 0, %s24
      %s27 = sphi 0, %s25
      %s28 = sphi 0, %s26
      %s40 = sphi 0, %s42
      %s43 = sphi 0, %s40
      %s44 = sphi 0, %s43
      %s60 = sphi 0, %s44
      %s66 = sphi 0, %s68
      %s69 = sphi 0, %s66
      %s70 = sphi 0, %s69
      %s86 = sphi 0, %s70
      %s90 = sphi 0, %s90
      %s92 = sphi 0, %s90
      %s93 = sphi 0, %s92
      %s107 = sphi 0, %s93
      %s113 = sphi 0, %s115
      %s116 = sphi 0, %s113
      %s117 = sphi 0, %s116
      %s133 = sphi 0, %s117
    $region4: #{tpu_custom_call.1} parent=1 // loop_header_branch
      %19 = sbr.rel (%p17) target = $region8
    $region5: #{tpu_custom_call.1} parent=1 // loop_body
      %s21 = ssub.s32 %s16, 1
      %s22 = ssub.s32 %s16, 2
      %s29 = sadd.s32 1, %s24
      %p30 = scmp.ge.s32.totalorder %s29, 5
      %s31 = scalar_select %p30, 0, %s29
      %s32 = sadd.s32 1, %s23
      %s33 = scalar_select %p30, %s32, %s23
      %p34 = scmp.ge.s32.totalorder %s33, 1
      %s35 = scalar_select %p34, 0, %s33
      %s36 = ssub.s32 %s23, %s35
      %s37 = ssub.s32 %s24, %s31
      %s38 = sor.u32 %s36, %s37
      %p39 = scmp.eq.s32.totalorder %s38, 0
      %s41 = sadd.s32 %s40, 1
      %s42 = scalar_select %p39, %s40, %s41
      %p45 = pneg %p39
      %p46 = scmp.eq.s32.totalorder %s16, 4
      %p47 = por %p45, %p46
      %p48 = scmp.ne.s32.totalorder %s40, %s43
      %p49 = scmp.eq.s32.totalorder %s16, 0
      %p50 = por %p48, %p49
      %p51 = scmp.ne.s32.totalorder %s40, %s43
      %p52 = scmp.eq.s32.totalorder %s21, 4
      %p53 = por %p51, %p52
      %p54 = scmp.ne.s32.totalorder %s43, %s44
      %p55 = scmp.eq.s32.totalorder %s21, 0
      %p56 = por %p54, %p55
      %p57 = scmp.ne.s32.totalorder %s43, %s44
      %p58 = scmp.eq.s32.totalorder %s22, 4
      %p59 = por %p57, %p58
      %p61 = scmp.ne.s32.totalorder %s44, %s60
      %p62 = scmp.eq.s32.totalorder %s22, 0
      %p63 = por %p61, %p62
      %s64 = ssub.s32 %s24, %s31
      %p65 = scmp.eq.s32.totalorder %s64, 0
      %s67 = sadd.s32 %s66, 1
      %s68 = scalar_select %p65, %s66, %s67
      %p71 = pneg %p65
      %p72 = scmp.eq.s32.totalorder %s16, 4
      %p73 = por %p71, %p72
      %p74 = scmp.ne.s32.totalorder %s66, %s69
      %p75 = scmp.eq.s32.totalorder %s16, 0
      %p76 = por %p74, %p75
      %p77 = scmp.ne.s32.totalorder %s66, %s69
      %p78 = scmp.eq.s32.totalorder %s21, 4
      %p79 = por %p77, %p78
      %p80 = scmp.ne.s32.totalorder %s69, %s70
      %p81 = scmp.eq.s32.totalorder %s21, 0
      %p82 = por %p80, %p81
      %p83 = scmp.ne.s32.totalorder %s69, %s70
      %p84 = scmp.eq.s32.totalorder %s22, 4
      %p85 = por %p83, %p84
      %p87 = scmp.ne.s32.totalorder %s70, %s86
      %p88 = scmp.eq.s32.totalorder %s22, 0
      %p89 = por %p87, %p88
      %s91 = sadd.s32 %s90, 1
      %p94 = scmp.eq.s32.totalorder %s16, 4
      %p95 = scmp.ne.s32.totalorder %s90, %s92
      %p96 = scmp.eq.s32.totalorder %s16, 0
      %p97 = por %p95, %p96
      %p98 = scmp.ne.s32.totalorder %s90, %s92
      %p99 = scmp.eq.s32.totalorder %s21, 4
      %p100 = por %p98, %p99
      %p101 = scmp.ne.s32.totalorder %s92, %s93
      %p102 = scmp.eq.s32.totalorder %s21, 0
      %p103 = por %p101, %p102
      %p104 = scmp.ne.s32.totalorder %s92, %s93
      %p105 = scmp.eq.s32.totalorder %s22, 4
      %p106 = por %p104, %p105
      %p108 = scmp.ne.s32.totalorder %s93, %s107
      %p109 = scmp.eq.s32.totalorder %s22, 0
      %p110 = por %p108, %p109
      %s111 = ssub.s32 %s23, %s35
      %p112 = scmp.eq.s32.totalorder %s111, 0
      %s114 = sadd.s32 %s113, 1
      %s115 = scalar_select %p112, %s113, %s114
      %p118 = pneg %p112
      %p119 = scmp.eq.s32.totalorder %s16, 4
      %p120 = por %p118, %p119
      %p121 = scmp.ne.s32.totalorder %s113, %s116
      %p122 = scmp.eq.s32.totalorder %s16, 0
      %p123 = por %p121, %p122
      %p124 = scmp.ne.s32.totalorder %s113, %s116
      %p125 = scmp.eq.s32.totalorder %s21, 4
      %p126 = por %p124, %p125
      %p127 = scmp.ne.s32.totalorder %s116, %s117
      %p128 = scmp.eq.s32.totalorder %s21, 0
      %p129 = por %p127, %p128
      %p130 = scmp.ne.s32.totalorder %s116, %s117
      %p131 = scmp.eq.s32.totalorder %s22, 4
      %p132 = por %p130, %p131
      %p134 = scmp.ne.s32.totalorder %s117, %s133
      %p135 = scmp.eq.s32.totalorder %s22, 0
      %p136 = por %p134, %p135
      %p137 = scmp.le.s32.totalorder 1, %s16
      %p138 = scmp.lt.s32.totalorder %s16, 6
      %p139 = pnand %p137, %p138
      %p140 = pneg %p139
      // Predicated region
      $region9: #{tpu_custom_call.1} parent=5 // pred_check
        _
      $region10: #{tpu_custom_call.1} parent=5 // pred_check_branch
        %142 = sbr.rel (%p139) target = $region12
      $region11: #{tpu_custom_call.1} parent=5 // pred_region
        %s143 = ssub.s32 %s16, 1
        // Predicated region
        $region13: #{tpu_custom_call.1} parent=11 // pred_check
          %p144 = pneg %p103
        $region14: #{tpu_custom_call.1} parent=11 // pred_check_branch
          %146 = sbr.rel (%p144) target = $region16
        $region15: #{tpu_custom_call.1} parent=11 // pred_region
          _
        $region16: #{tpu_custom_call.1} parent=11 // pred_fallthru
          _
      $region12: #{tpu_custom_call.1} parent=5 // pred_fallthru
        _
      %p147 = scmp.lt.s32.totalorder %s16, 5
      // Predicated region
      $region17: #{tpu_custom_call.1} parent=5 // pred_check
        %p148 = pneg %p147
      $region18: #{tpu_custom_call.1} parent=5 // pred_check_branch
        %150 = sbr.rel (%p148) target = $region20
      $region19: #{tpu_custom_call.1} parent=5 // pred_region
        // Predicated region
        $region21: #{tpu_custom_call.1} parent=19 // pred_check
          %p151 = pneg %p50
        $region22: #{tpu_custom_call.1} parent=19 // pred_check_branch
          %153 = sbr.rel (%p151) target = $region24
        $region23: #{tpu_custom_call.1} parent=19 // pred_region
          %s154 = sand.u32 %s40, 1
          %s155 = scalar_lea.sflag [#allocation4], %s154
          %s156 = sand.u32 %s40, 1
          %s157 = smul.addr %s156, 32
          %s158 = scalar_lea.vmem [#allocation3], %s157
          %s159 = smul.u32 2, %s23
          %s160 = smul.u32 4, %s24
          %s162 = ssub.s32 512, 512
          %163 = vsyncadd %s155, %s162
          %s164 = smul.addr %s159, 20
          %s165 = sadd.s32 %s160, %s164
          %s166 = smul.addr %s165, 64
          %s167 = scalar_lea.hbm %s0, %s166
          %s168 = sshll.u32 %s158, 4
          %s169 = int_to_ptr.vmem [resolvable:$true] %s168
          %174 = dma.hbm_to_vmem [thread:$0]  %s167, 512, %s169, %s155, 1280, 256, 16
        $region24: #{tpu_custom_call.1} parent=19 // pred_fallthru
          _
        // Predicated region
        $region25: #{tpu_custom_call.1} parent=19 // pred_check
          %p175 = pneg %p76
        $region26: #{tpu_custom_call.1} parent=19 // pred_check_branch
          %177 = sbr.rel (%p175) target = $region28
        $region27: #{tpu_custom_call.1} parent=19 // pred_region
          %s178 = sand.u32 %s66, 1
          %s179 = scalar_lea.sflag [#allocation7], %s178
          %s180 = sand.u32 %s66, 1
          %s181 = smul.addr %s180, 256
          %s182 = scalar_lea.vmem [#allocation6], %s181
          %s183 = smul.u32 64, %s24
          %s185 = ssub.s32 4096, 4096
          %186 = vsyncadd %s179, %s185
          %s187 = smul.addr %s183, 64
          %s188 = scalar_lea.hbm %s1, %s187
          %s189 = sshll.u32 %s182, 4
          %s190 = int_to_ptr.vmem [resolvable:$true] %s189
          %195 = dma.hbm_to_vmem [thread:$0]  %s188, 4096, %s190, %s179, 64, 64, 4
        $region28: #{tpu_custom_call.1} parent=19 // pred_fallthru
          _
      $region20: #{tpu_custom_call.1} parent=5 // pred_fallthru
        _
      %p196 = scmp.le.s32.totalorder 1, %s16
      %p197 = scmp.lt.s32.totalorder %s16, 6
      %p198 = pnand %p196, %p197
      %p199 = pneg %p198
      // Predicated region
      $region29: #{tpu_custom_call.1} parent=5 // pred_check
        _
      $region30: #{tpu_custom_call.1} parent=5 // pred_check_branch
        %201 = sbr.rel (%p198) target = $region32
      $region31: #{tpu_custom_call.1} parent=5 // pred_region
        %s202 = ssub.s32 %s16, 1
        %s203 = sand.u32 %s43, 1
        %s204 = scalar_lea.sflag [#allocation4], %s203
        %s205 = sand.u32 %s43, 1
        %s206 = smul.addr %s205, 32
        %s207 = scalar_lea.vmem [#allocation3], %s206
        // Predicated region
        $region33: #{tpu_custom_call.1} parent=31 // pred_check
          %p208 = pneg %p56
        $region34: #{tpu_custom_call.1} parent=31 // pred_check_branch
          %210 = sbr.rel (%p208) target = $region36
        $region35: #{tpu_custom_call.1} parent=31 // pred_region
          %211 = dma.done %s204, 512
        $region36: #{tpu_custom_call.1} parent=31 // pred_fallthru
          _
        %s212 = sand.u32 %s69, 1
        %s213 = scalar_lea.sflag [#allocation7], %s212
        %s214 = sand.u32 %s69, 1
        %s215 = smul.addr %s214, 256
        %s216 = scalar_lea.vmem [#allocation6], %s215
        // Predicated region
        $region37: #{tpu_custom_call.1} parent=31 // pred_check
          %p217 = pneg %p82
        $region38: #{tpu_custom_call.1} parent=31 // pred_check_branch
          %219 = sbr.rel (%p217) target = $region40
        $region39: #{tpu_custom_call.1} parent=31 // pred_region
          %220 = dma.done %s213, 4096
        $region40: #{tpu_custom_call.1} parent=31 // pred_fallthru
          _
        %s221 = sand.u32 %s43, 1
        %s222 = scalar_lea.sflag [#allocation4], %s221
        %s223 = sand.u32 %s43, 1
        %s224 = smul.addr %s223, 32
        %s225 = scalar_lea.vmem [#allocation3], %s224
        %p226 = pneg %p56
        %p227 = pneg %p53
        %s228 = sand.u32 %s69, 1
        %s229 = scalar_lea.sflag [#allocation7], %s228
        %s230 = sand.u32 %s69, 1
        %s231 = smul.addr %s230, 256
        %s232 = scalar_lea.vmem [#allocation6], %s231
        %p233 = pneg %p82
        %p234 = pneg %p79
        %p235 = pneg %p103
        %p236 = pneg %p100
        %p237 = pneg %p129
        %p238 = pneg %p126
        %s239 = smul.u32 2, %s25
        %s240 = smul.u32 4, %s26
        %s241 = smul.u32 64, %s26
        %s242 = smul.u32 2, %s25
        %p244 = scmp.eq.s32.totalorder %s26, 0
        // Predicated region
        $region41: #{tpu_custom_call.1} parent=31 // pred_check
          %p245 = pneg %p244
        $region42: #{tpu_custom_call.1} parent=31 // pred_check_branch
          %247 = sbr.rel (%p245) target = $region44
        $region43: #{tpu_custom_call.1} parent=31 // pred_region
          %248 = vst [vmem:[#allocation2] sm:$0xff] 0.0
          %249 = vst [vmem:[#allocation2 + $0x8] sm:$0xff] 0.0
        $region44: #{tpu_custom_call.1} parent=31 // pred_fallthru
          _
        %v250 = vld [vmem:[#allocation2] sm:$0xff]
        %v251 = vld [vmem:[#allocation2 + $0x8] sm:$0xff]
        %v252 = vld [vmem:[%s207] sm:$0xff]
        %v253 = vld [vmem:[%s207 + $0x8] sm:$0xff]
        %v254 = vld [vmem:[%s207 + $0x10] sm:$0xff]
        %v255 = vld [vmem:[%s207 + $0x18] sm:$0xff]
        %v256 = vld [vmem:[%s216] sm:$0xf]
        %v257 = vld [vmem:[%s216 + $0x4] sm:$0xf]
        %v258 = vld [vmem:[%s216 + $0x8] sm:$0xf]
        %v259 = vld [vmem:[%s216 + $0xc] sm:$0xf]
        %v260 = vld [vmem:[%s216 + $0x10] sm:$0xf]
        %v261 = vld [vmem:[%s216 + $0x14] sm:$0xf]
        %v262 = vld [vmem:[%s216 + $0x18] sm:$0xf]
        %v263 = vld [vmem:[%s216 + $0x1c] sm:$0xf]
        %v264 = vld [vmem:[%s216 + $0x20] sm:$0xf]
        %v265 = vld [vmem:[%s216 + $0x24] sm:$0xf]
        %v266 = vld [vmem:[%s216 + $0x28] sm:$0xf]
        %v267 = vld [vmem:[%s216 + $0x2c] sm:$0xf]
        %v268 = vld [vmem:[%s216 + $0x30] sm:$0xf]
        %v269 = vld [vmem:[%s216 + $0x34] sm:$0xf]
        %v270 = vld [vmem:[%s216 + $0x38] sm:$0xf]
        %v271 = vld [vmem:[%s216 + $0x3c] sm:$0xf]
        %v272 = vld [vmem:[%s216 + $0x40] sm:$0xf]
        %v273 = vld [vmem:[%s216 + $0x44] sm:$0xf]
        %v274 = vld [vmem:[%s216 + $0x48] sm:$0xf]
        %v275 = vld [vmem:[%s216 + $0x4c] sm:$0xf]
        %v276 = vld [vmem:[%s216 + $0x50] sm:$0xf]
        %v277 = vld [vmem:[%s216 + $0x54] sm:$0xf]
        %v278 = vld [vmem:[%s216 + $0x58] sm:$0xf]
        %v279 = vld [vmem:[%s216 + $0x5c] sm:$0xf]
        %v280 = vld [vmem:[%s216 + $0x60] sm:$0xf]
        %v281 = vld [vmem:[%s216 + $0x64] sm:$0xf]
        %v282 = vld [vmem:[%s216 + $0x68] sm:$0xf]
        %v283 = vld [vmem:[%s216 + $0x6c] sm:$0xf]
        %v284 = vld [vmem:[%s216 + $0x70] sm:$0xf]
        %v285 = vld [vmem:[%s216 + $0x74] sm:$0xf]
        %v286 = vld [vmem:[%s216 + $0x78] sm:$0xf]
        %v287 = vld [vmem:[%s216 + $0x7c] sm:$0xf]
        %v288 = vld [vmem:[%s216 + $0x80] sm:$0xf]
        %v289 = vld [vmem:[%s216 + $0x84] sm:$0xf]
        %v290 = vld [vmem:[%s216 + $0x88] sm:$0xf]
        %v291 = vld [vmem:[%s216 + $0x8c] sm:$0xf]
        %v292 = vld [vmem:[%s216 + $0x90] sm:$0xf]
        %v293 = vld [vmem:[%s216 + $0x94] sm:$0xf]
        %v294 = vld [vmem:[%s216 + $0x98] sm:$0xf]
        %v295 = vld [vmem:[%s216 + $0x9c] sm:$0xf]
        %v296 = vld [vmem:[%s216 + $0xa0] sm:$0xf]
        %v297 = vld [vmem:[%s216 + $0xa4] sm:$0xf]
        %v298 = vld [vmem:[%s216 + $0xa8] sm:$0xf]
        %v299 = vld [vmem:[%s216 + $0xac] sm:$0xf]
        %v300 = vld [vmem:[%s216 + $0xb0] sm:$0xf]
        %v301 = vld [vmem:[%s216 + $0xb4] sm:$0xf]
        %v302 = vld [vmem:[%s216 + $0xb8] sm:$0xf]
        %v303 = vld [vmem:[%s216 + $0xbc] sm:$0xf]
        %v304 = vld [vmem:[%s216 + $0xc0] sm:$0xf]
        %v305 = vld [vmem:[%s216 + $0xc4] sm:$0xf]
        %v306 = vld [vmem:[%s216 + $0xc8] sm:$0xf]
        %v307 = vld [vmem:[%s216 + $0xcc] sm:$0xf]
        %v308 = vld [vmem:[%s216 + $0xd0] sm:$0xf]
        %v309 = vld [vmem:[%s216 + $0xd4] sm:$0xf]
        %v310 = vld [vmem:[%s216 + $0xd8] sm:$0xf]
        %v311 = vld [vmem:[%s216 + $0xdc] sm:$0xf]
        %v312 = vld [vmem:[%s216 + $0xe0] sm:$0xf]
        %v313 = vld [vmem:[%s216 + $0xe4] sm:$0xf]
        %v314 = vld [vmem:[%s216 + $0xe8] sm:$0xf]
        %v315 = vld [vmem:[%s216 + $0xec] sm:$0xf]
        %v316 = vld [vmem:[%s216 + $0xf0] sm:$0xf]
        %v317 = vld [vmem:[%s216 + $0xf4] sm:$0xf]
        %v318 = vld [vmem:[%s216 + $0xf8] sm:$0xf]
        %v319 = vld [vmem:[%s216 + $0xfc] sm:$0xf]
        %v324 = vunpack.c.l.b16 %v252
        %v325 = vunpack.c.h.b16 %v252
        %v326 = vunpack.c.l.b16 %v253
        %v327 = vunpack.c.h.b16 %v253
        %v328 = vunpack.c.l.b16 %v254
        %v329 = vunpack.c.h.b16 %v254
        %v330 = vunpack.c.l.b16 %v255
        %v331 = vunpack.c.h.b16 %v255
        %v332 = vpack.c.b16 %v328, %v324
        %v333 = vpack.c.b16 %v329, %v325
        %v334 = vpack.c.b16 %v330, %v326
        %v335 = vpack.c.b16 %v331, %v327
        %v404 = vunpack.c.l.b16 %v256
        %v405 = vunpack.c.l.b16 %v257
        %v406 = vunpack.c.l.b16 %v258
        %v407 = vunpack.c.l.b16 %v259
        %v408 = vunpack.c.l.b16 %v260
        %v409 = vunpack.c.l.b16 %v261
        %v410 = vunpack.c.l.b16 %v262
        %v411 = vunpack.c.l.b16 %v263
        %v412 = vunpack.c.l.b16 %v264
        %v413 = vunpack.c.l.b16 %v265
        %v414 = vunpack.c.l.b16 %v266
        %v415 = vunpack.c.l.b16 %v267
        %v416 = vunpack.c.l.b16 %v268
        %v417 = vunpack.c.l.b16 %v269
        %v418 = vunpack.c.l.b16 %v270
        %v419 = vunpack.c.l.b16 %v271
        %v420 = vunpack.c.l.b16 %v272
        %v421 = vunpack.c.l.b16 %v273
        %v422 = vunpack.c.l.b16 %v274
        %v423 = vunpack.c.l.b16 %v275
        %v424 = vunpack.c.l.b16 %v276
        %v425 = vunpack.c.l.b16 %v277
        %v426 = vunpack.c.l.b16 %v278
        %v427 = vunpack.c.l.b16 %v279
        %v428 = vunpack.c.l.b16 %v280
        %v429 = vunpack.c.l.b16 %v281
        %v430 = vunpack.c.l.b16 %v282
        %v431 = vunpack.c.l.b16 %v283
        %v432 = vunpack.c.l.b16 %v284
        %v433 = vunpack.c.l.b16 %v285
        %v434 = vunpack.c.l.b16 %v286
        %v435 = vunpack.c.l.b16 %v287
        %v436 = vunpack.c.l.b16 %v288
        %v437 = vunpack.c.l.b16 %v289
        %v438 = vunpack.c.l.b16 %v290
        %v439 = vunpack.c.l.b16 %v291
        %v440 = vunpack.c.l.b16 %v292
        %v441 = vunpack.c.l.b16 %v293
        %v442 = vunpack.c.l.b16 %v294
        %v443 = vunpack.c.l.b16 %v295
        %v444 = vunpack.c.l.b16 %v296
        %v445 = vunpack.c.l.b16 %v297
        %v446 = vunpack.c.l.b16 %v298
        %v447 = vunpack.c.l.b16 %v299
        %v448 = vunpack.c.l.b16 %v300
        %v449 = vunpack.c.l.b16 %v301
        %v450 = vunpack.c.l.b16 %v302
        %v451 = vunpack.c.l.b16 %v303
        %v452 = vunpack.c.l.b16 %v304
        %v453 = vunpack.c.l.b16 %v305
        %v454 = vunpack.c.l.b16 %v306
        %v455 = vunpack.c.l.b16 %v307
        %v456 = vunpack.c.l.b16 %v308
        %v457 = vunpack.c.l.b16 %v309
        %v458 = vunpack.c.l.b16 %v310
        %v459 = vunpack.c.l.b16 %v311
        %v460 = vunpack.c.l.b16 %v312
        %v461 = vunpack.c.l.b16 %v313
        %v462 = vunpack.c.l.b16 %v314
        %v463 = vunpack.c.l.b16 %v315
        %v464 = vunpack.c.l.b16 %v316
        %v465 = vunpack.c.l.b16 %v317
        %v466 = vunpack.c.l.b16 %v318
        %v467 = vunpack.c.l.b16 %v319
        %v468 = vpack.c.b16 %v405, %v404
        %v469 = vpack.c.b16 %v407, %v406
        %v470 = vpack.c.b16 %v409, %v408
        %v471 = vpack.c.b16 %v411, %v410
        %v472 = vpack.c.b16 %v413, %v412
        %v473 = vpack.c.b16 %v415, %v414
        %v474 = vpack.c.b16 %v417, %v416
        %v475 = vpack.c.b16 %v419, %v418
        %v476 = vpack.c.b16 %v421, %v420
        %v477 = vpack.c.b16 %v423, %v422
        %v478 = vpack.c.b16 %v425, %v424
        %v479 = vpack.c.b16 %v427, %v426
        %v480 = vpack.c.b16 %v429, %v428
        %v481 = vpack.c.b16 %v431, %v430
        %v482 = vpack.c.b16 %v433, %v432
        %v483 = vpack.c.b16 %v435, %v434
        %v484 = vpack.c.b16 %v437, %v436
        %v485 = vpack.c.b16 %v439, %v438
        %v486 = vpack.c.b16 %v441, %v440
        %v487 = vpack.c.b16 %v443, %v442
        %v488 = vpack.c.b16 %v445, %v444
        %v489 = vpack.c.b16 %v447, %v446
        %v490 = vpack.c.b16 %v449, %v448
        %v491 = vpack.c.b16 %v451, %v450
        %v492 = vpack.c.b16 %v453, %v452
        %v493 = vpack.c.b16 %v455, %v454
        %v494 = vpack.c.b16 %v457, %v456
        %v495 = vpack.c.b16 %v459, %v458
        %v496 = vpack.c.b16 %v461, %v460
        %v497 = vpack.c.b16 %v463, %v462
        %v498 = vpack.c.b16 %v465, %v464
        %v499 = vpack.c.b16 %v467, %v466
        %532 = vmatprep.subr.bf16.mxu0 0
        %533 = vmatpush1.bf16.msra.mxu0 %v468
        %534 = vmatprep.subr.bf16.mxu0 0
        %535 = vmatpush1.bf16.msra.mxu0 %v469
        %536 = vmatprep.subr.bf16.mxu0 0
        %537 = vmatpush1.bf16.msra.mxu0 %v470
        %538 = vmatprep.subr.bf16.mxu0 0
        %539 = vmatpush1.bf16.msra.mxu0 %v471
        %540 = vmatprep.subr.bf16.mxu0 0
        %541 = vmatpush1.bf16.msra.mxu0 %v472
        %542 = vmatprep.subr.bf16.mxu0 0
        %543 = vmatpush1.bf16.msra.mxu0 %v473
        %544 = vmatprep.subr.bf16.mxu0 0
        %545 = vmatpush1.bf16.msra.mxu0 %v474
        %546 = vmatprep.subr.bf16.mxu0 0
        %547 = vmatpush1.bf16.msra.mxu0 %v475
        %548 = vmatprep.subr.bf16.mxu0 0
        %549 = vmatpush1.bf16.msra.mxu0 %v476
        %550 = vmatprep.subr.bf16.mxu0 0
        %551 = vmatpush1.bf16.msra.mxu0 %v477
        %552 = vmatprep.subr.bf16.mxu0 0
        %553 = vmatpush1.bf16.msra.mxu0 %v478
        %554 = vmatprep.subr.bf16.mxu0 0
        %555 = vmatpush1.bf16.msra.mxu0 %v479
        %556 = vmatprep.subr.bf16.mxu0 0
        %557 = vmatpush1.bf16.msra.mxu0 %v480
        %558 = vmatprep.subr.bf16.mxu0 0
        %559 = vmatpush1.bf16.msra.mxu0 %v481
        %560 = vmatprep.subr.bf16.mxu0 0
        %561 = vmatpush1.bf16.msra.mxu0 %v482
        %562 = vmatprep.subr.bf16.mxu0 0
        %563 = vmatpush1.bf16.msra.mxu0 %v483
        %564 = vmatprep.mubr.bf16.mxu0 %v333
        %565 = vmatmul.mubr.bf16.gmra.mrb[0].mxu0 %v332
        %v566 = vpop.f32.mrb[0].mxu0
        %v567 = vadd.f32 0.0, %v566
        %v568 = vpop.f32.mrb[0].mxu0
        %v569 = vpop.f32.mrb[0].mxu0
        %v570 = vadd.f32 0.0, %v569
        %v571 = vpop.f32.mrb[0].mxu0
        %572 = vdwg.mxu0
        %573 = vmatprep.subr.bf16.mxu0 0
        %574 = vmatpush1.bf16.msra.mxu0 %v484
        %575 = vmatprep.subr.bf16.mxu0 0
        %576 = vmatpush1.bf16.msra.mxu0 %v485
        %577 = vmatprep.subr.bf16.mxu0 0
        %578 = vmatpush1.bf16.msra.mxu0 %v486
        %579 = vmatprep.subr.bf16.mxu0 0
        %580 = vmatpush1.bf16.msra.mxu0 %v487
        %581 = vmatprep.subr.bf16.mxu0 0
        %582 = vmatpush1.bf16.msra.mxu0 %v488
        %583 = vmatprep.subr.bf16.mxu0 0
        %584 = vmatpush1.bf16.msra.mxu0 %v489
        %585 = vmatprep.subr.bf16.mxu0 0
        %586 = vmatpush1.bf16.msra.mxu0 %v490
        %587 = vmatprep.subr.bf16.mxu0 0
        %588 = vmatpush1.bf16.msra.mxu0 %v491
        %589 = vmatprep.subr.bf16.mxu0 0
        %590 = vmatpush1.bf16.msra.mxu0 %v492
        %591 = vmatprep.subr.bf16.mxu0 0
        %592 = vmatpush1.bf16.msra.mxu0 %v493
        %593 = vmatprep.subr.bf16.mxu0 0
        %594 = vmatpush1.bf16.msra.mxu0 %v494
        %595 = vmatprep.subr.bf16.mxu0 0
        %596 = vmatpush1.bf16.msra.mxu0 %v495
        %597 = vmatprep.subr.bf16.mxu0 0
        %598 = vmatpush1.bf16.msra.mxu0 %v496
        %599 = vmatprep.subr.bf16.mxu0 0
        %600 = vmatpush1.bf16.msra.mxu0 %v497
        %601 = vmatprep.subr.bf16.mxu0 0
        %602 = vmatpush1.bf16.msra.mxu0 %v498
        %603 = vmatprep.subr.bf16.mxu0 0
        %604 = vmatpush1.bf16.msra.mxu0 %v499
        %605 = vmatprep.mubr.bf16.mxu0 %v335
        %606 = vmatmul.mubr.bf16.gmra.mrb[0].mxu0 %v334
        %v607 = vpop.f32.mrb[0].mxu0
        %v608 = vadd.f32 %v567, %v607
        %v609 = vpop.f32.mrb[0].mxu0
        %v610 = vpop.f32.mrb[0].mxu0
        %v611 = vadd.f32 %v570, %v610
        %v612 = vpop.f32.mrb[0].mxu0
        %613 = vdwg.mxu0
        %v614 = vadd.f32 %v250, %v608
        %v615 = vadd.f32 %v251, %v611
        %616 = vst [vmem:[#allocation2] sm:$0xff] %v614
        %617 = vst [vmem:[#allocation2 + $0x8] sm:$0xff] %v615
        %p618 = scmp.eq.s32.totalorder %s26, 4
        // Predicated region
        $region45: #{tpu_custom_call.1} parent=31 // pred_check
          %p619 = pneg %p618
        $region46: #{tpu_custom_call.1} parent=31 // pred_check_branch
          %621 = sbr.rel (%p619) target = $region48
        $region47: #{tpu_custom_call.1} parent=31 // pred_region
          %v622 = vld [vmem:[#allocation2] sm:$0xff]
          %v623 = vld [vmem:[#allocation2 + $0x8] sm:$0xff]
          %v624 = vld [vmem:[%s2] sm:$0x1]
          %v626 = vlaneseq
          %v627 = vshrl.u32 %v626, 7
          %v628 = vsub.s32 0, %v627
          %v629 = vrot.slane %v624, %v628
          %v631 = vadd.f32 %v622, %v629
          %v632 = vadd.f32 %v623, %v629
          %633 = vst [vmem:[#allocation8] sm:$0xff] %v631
          %634 = vst [vmem:[#allocation8 + $0x8] sm:$0xff] %v632
        $region48: #{tpu_custom_call.1} parent=31 // pred_fallthru
          _
        // Predicated region
        $region49: #{tpu_custom_call.1} parent=31 // pred_check
          %p635 = pneg %p126
        $region50: #{tpu_custom_call.1} parent=31 // pred_check_branch
          %637 = sbr.rel (%p635) target = $region52
        $region51: #{tpu_custom_call.1} parent=31 // pred_region
          %s638 = smul.u32 2, %s25
          %s640 = ssub.s32 256, 256
          %641 = vsyncadd [#allocation5], %s640
          %s642 = smul.addr %s638, 128
          %s643 = scalar_lea.hbm %s3, %s642
          %s644 = sshll.u32 [#allocation8], 4
          %s645 = int_to_ptr.vmem [resolvable:$true] %s644
          %650 = dma.vmem_to_hbm [thread:$0]  %s645, 256, %s643, [#allocation5], 128, 128, 8
        $region52: #{tpu_custom_call.1} parent=31 // pred_fallthru
          _
        // Predicated region
        $region53: #{tpu_custom_call.1} parent=31 // pred_check
          %p651 = pneg %p126
        $region54: #{tpu_custom_call.1} parent=31 // pred_check_branch
          %653 = sbr.rel (%p651) target = $region56
        $region55: #{tpu_custom_call.1} parent=31 // pred_region
          %654 = dma.done [#allocation5], 256
        $region56: #{tpu_custom_call.1} parent=31 // pred_fallthru
          _
      $region32: #{tpu_custom_call.1} parent=5 // pred_fallthru
        _
      %p655 = scmp.le.s32.totalorder 2, %s16
      // Predicated region
      $region57: #{tpu_custom_call.1} parent=5 // pred_check
        %p656 = pneg %p655
      $region58: #{tpu_custom_call.1} parent=5 // pred_check_branch
        %658 = sbr.rel (%p656) target = $region60
      $region59: #{tpu_custom_call.1} parent=5 // pred_region
        %s659 = ssub.s32 %s16, 2
      $region60: #{tpu_custom_call.1} parent=5 // pred_fallthru
        _
    $region6: #{tpu_custom_call.1} parent=1 // loop_footer
      %s20 = sadd.s32 1, %s16
    $region7: #{tpu_custom_call.1} parent=1 // loop_footer_branch
      %15 = sbr.rel target = $region3
    $region8: #{tpu_custom_call.1} parent=1 // loop_exit
      _
    %660 = vsyncpa [#allocation4], 1
    %s661 = scalar_lea.sflag [#allocation4], 1
    %662 = vsyncpa %s661, 1
    %663 = vsyncpa [#allocation7], 1
    %s664 = scalar_lea.sflag [#allocation7], 1
    %665 = vsyncpa %s664, 1
    %666 = vsyncpa [#allocation5], 1
    %s667 = scalar_lea.sflag [#allocation5], 1
    %668 = vsyncpa %s667, 1

</llo_original>
